<compile_context>
chip_gen: v5e
topology: v5e:2x2
jax: 0.10.0
libtpu: 0.0.40
codegen_flags: <defaults>
</compile_context>

<pallas_src>
import functools
import math

import jax
import jax.numpy as jnp
from jax.experimental import pallas as pl
from jax.experimental.pallas import tpu as pltpu

_LANE = 128
_PREFERRED_TILE_N = 512

# Flipped to False at runtime if this jax/backend rejects pl.Buffered(1).
_SINGLE_BUFFER_RESIDENT = True


def _round_up(n, m):
    return ((n + m - 1) // m) * m


def _apply_activation(y, activation):
    if activation == "relu":
        return jnp.maximum(y, 0.0)
    if activation == "sigmoid":
        # exp + approx reciprocal both land on the EUP slot; VPU stays free.
        # approx recip => tiny relative error vs exact 1/(1+exp(-y)).
        # NOTE(v5e): non-relu activations push one transcendental per hidden
        # element through the single f32-only EUP; check EUP slot utilization
        # before tuning other units.
        return pl.reciprocal(1.0 + jnp.exp(-y), approx=True)
    if activation == "tanh":
        return jnp.tanh(y)
    if activation == "elu":
        return jnp.where(y > 0, y, jnp.expm1(y))
    raise ValueError(f"Unsupported activation function: {activation}")


def _make_mlp_kernel(num_linear, activation):
    """Fused kernel: x -> [Linear + act] * (L-1) -> Linear -> logits."""

    def kernel(*refs):
        x_ref = refs[0]
        o_ref = refs[1 + 2 * num_linear]
        h = x_ref[...].astype(jnp.bfloat16)              # in-kernel cast (f32 DMA in)
        for l in range(num_linear):                      # statically unrolled
            w_ref = refs[1 + 2 * l]
            b_ref = refs[2 + 2 * l]
            # MXU matmul in bf16, f32 accumulation.
            y = jnp.dot(h, w_ref[...], preferred_element_type=jnp.float32)
            y = y + b_ref[...]                           # (1, d_out) row-broadcast
            if l < num_linear - 1:
                y = _apply_activation(y, activation)
                # TODO(synk): nn.Dropout(p=0.2) is the eval-mode identity here
                # (inference forward); do not reuse this kernel for training.
                h = y.astype(jnp.bfloat16)
            else:
                # f32 logits, lane-padded to 128: the write amplification for a
                # tiny n_classes head is intentional (unmasked lane-dense vst).
                o_ref[...] = y.astype(o_ref.dtype)

    return kernel


def prepare_params(params):
    """One-time weight prep: pad hidden/output dims to 128 lanes, cast to bf16.

    Call once and reuse across forward calls so the per-call forward pays no
    weight pad/convert HBM traffic.
    """
    d_in = params[0][0].shape[0]
    dims = [d_in] + [w.shape[1] for w, _ in params]
    # The first contraction dim (d_in) stays unpadded: x is fed unpadded and a
    # full-array weight block satisfies the (8,128) rule automatically.
    dims_pad = [d_in] + [_round_up(d, _LANE) for d in dims[1:]]
    ws, bs = [], []
    for l, (w, b) in enumerate(params):
        w_p = jnp.pad(w, ((0, dims_pad[l] - w.shape[0]),
                          (0, dims_pad[l + 1] - w.shape[1]))).astype(jnp.bfloat16)
        b_p = jnp.pad(b.astype(jnp.float32), (0, dims_pad[l + 1] - b.shape[0]))
        ws.append(w_p)
        bs.append(b_p.reshape(1, dims_pad[l + 1]))
    return {
        "ws": tuple(ws),
        "bs": tuple(bs),
        "d_in": d_in,
        "dims_pad": tuple(dims_pad),
        "n_classes": params[-1][0].shape[1],
    }


def _vmem_cap_bytes():
    """Usable per-core VMEM: capacity minus headroom, never more than 112 MiB."""
    try:
        cap = int(pltpu.get_tpu_info().vmem_capacity_bytes)
    except Exception:
        cap = 64 << 20                    # conservative default = v7x per-TC VMEM
    return min(112 << 20, cap - (8 << 20))  # ~8 MiB for Mosaic internal scratch


def _plan_tiling(n, d_in, dims_pad, weight_bytes, vmem_cap, single_buffer):
    out_pad = dims_pad[-1]
    max_dim = max(max(dims_pad), d_in)
    resident = weight_bytes * (1 if single_buffer else 2)

    if resident > vmem_cap:
        # TODO(synk): weight-streaming fallback (pltpu.emit_pipeline over d_out
        # chunks per layer) for models whose bf16 weights exceed VMEM (e.g.
        # hidden_dim >= 2048 with 5 layers on v7x's 64 MiB).
        raise NotImplementedError(
            "MLP weights do not fit the VMEM-resident plan on this chip")

    def needed(t):
        io = 2 * t * d_in * 4 + 2 * t * out_pad * 4   # double-buffered x / out tiles
        act = t * max_dim * (4 + 2) * 2               # live f32 y + bf16 h, 2x headroom
        return resident + io + act + (2 << 20)

    if n <= 16:
        tile_n = n                                    # single tile == full batch dim
    else:
        # >= 2 grid steps so v7x's two TensorCores both get work under
        # dimension_semantics=("parallel",).
        half = _round_up(-(-n // 2), 16)
        tile_n = min(_PREFERRED_TILE_N, half)
        while tile_n > 16 and needed(tile_n) > vmem_cap:
            tile_n = max(16, _round_up(tile_n // 2, 16))

    n_pad = _round_up(n, tile_n)
    vmem_limit = int(min(vmem_cap, max(32 << 20, needed(tile_n))))
    return tile_n, n_pad, vmem_limit


@functools.partial(
    jax.jit,
    static_argnames=("activation_fn", "tile_n", "n_pad", "vmem_limit",
                     "single_buffer", "n_classes"))
def _mlp_forward_impl(ws, bs, x, *, activation_fn, tile_n, n_pad, vmem_limit,
                      single_buffer, n_classes):
    n, d_in = x.shape
    num_linear = len(ws)
    out_pad = ws[-1].shape[1]

    if n_pad != n:                                   # pad batch dim only when needed
        x = jnp.pad(x, ((0, n_pad - n), (0, 0)))

    def resident_spec(shape):
        # Constant index_map => block never changes; single-buffer it so the
        # resident weights cost 1x (not 2x) VMEM.
        if single_buffer:
            return pl.BlockSpec(shape, lambda i: (0, 0),
                                pipeline_mode=pl.Buffered(1))
        return pl.BlockSpec(shape, lambda i: (0, 0))

    in_specs = [pl.BlockSpec((tile_n, d_in), lambda i: (i, 0))]
    inputs = [x]
    for l in range(num_linear):
        in_specs.append(resident_spec(ws[l].shape))
        in_specs.append(resident_spec(bs[l].shape))
        inputs.append(ws[l])
        inputs.append(bs[l])

    out = pl.pallas_call(
        _make_mlp_kernel(num_linear, activation_fn),
        out_shape=jax.ShapeDtypeStruct((n_pad, out_pad), jnp.float32),
        grid=(n_pad // tile_n,),
        in_specs=in_specs,
        out_specs=pl.BlockSpec((tile_n, out_pad), lambda i: (i, 0)),
        compiler_params=pltpu.CompilerParams(
            dimension_semantics=("parallel",),
            vmem_limit_bytes=vmem_limit,
        ),
    )(*inputs)

    return out[:n, :n_classes]


def mlp_forward(prepped, x, activation_fn="relu"):
    """Forward pass matching MLP.forward (inference). x: (N, D) float32."""
    global _SINGLE_BUFFER_RESIDENT
    n, d_in = x.shape
    if d_in != prepped["d_in"]:
        raise ValueError(f"expected input dim {prepped['d_in']}, got {d_in}")

    ws, bs = prepped["ws"], prepped["bs"]
    weight_bytes = sum(w.size * w.dtype.itemsize for w in ws)
    weight_bytes += sum(b.size * b.dtype.itemsize for b in bs)
    vmem_cap = _vmem_cap_bytes()

    def run(single_buffer):
        tile_n, n_pad, vmem_limit = _plan_tiling(
            n, d_in, prepped["dims_pad"], weight_bytes, vmem_cap, single_buffer)
        return _mlp_forward_impl(
            ws, bs, x, activation_fn=activation_fn, tile_n=tile_n, n_pad=n_pad,
            vmem_limit=vmem_limit, single_buffer=single_buffer,
            n_classes=prepped["n_classes"])

    if _SINGLE_BUFFER_RESIDENT:
        try:
            return run(True)
        except NotImplementedError:
            raise
        except Exception:
            # pl.Buffered(1) not supported on this jax/backend: fall back to the
            # default double-buffered resident weights.
            _SINGLE_BUFFER_RESIDENT = False
    return run(False)


def init_mlp_params(key, input_size, n_classes, hidden_dim=512, num_layers=5,
                    use_bias=True):
    """Deterministic init mirroring nn.Linear defaults (uniform +-1/sqrt(fan_in))."""
    dims = [input_size] + [hidden_dim] * num_layers + [n_classes]
    params = []
    for d_in, d_out in zip(dims[:-1], dims[1:]):
        key, kw, kb = jax.random.split(key, 3)
        bound = 1.0 / math.sqrt(d_in)
        w = jax.random.uniform(kw, (d_in, d_out), jnp.float32, -bound, bound)
        if use_bias:
            b = jax.random.uniform(kb, (d_out,), jnp.float32, -bound, bound)
        else:
            b = jnp.zeros((d_out,), jnp.float32)
        params.append((w, b))
    return params


def _ref_forward(params, x, activation):
    """Pure-JAX reference with the same bf16-matmul / f32-accumulate recipe."""
    h = x
    for w, b in params[:-1]:
        h = jnp.dot(h.astype(jnp.bfloat16), w.astype(jnp.bfloat16),
                    preferred_element_type=jnp.float32) + b
        if activation == "relu":
            h = jnp.maximum(h, 0.0)
        elif activation == "sigmoid":
            h = 1.0 / (1.0 + jnp.exp(-h))
        elif activation == "tanh":
            h = jnp.tanh(h)
        elif activation == "elu":
            h = jnp.where(h > 0, h, jnp.expm1(h))
    w, b = params[-1]
    return jnp.dot(h.astype(jnp.bfloat16), w.astype(jnp.bfloat16),
                   preferred_element_type=jnp.float32) + b


if __name__ == "__main__":
    # Small shapes consistent with the module: input_size=64, hidden_dim=32,
    # num_layers=3, n_classes=10.
    INPUT_SIZE, HIDDEN_DIM, NUM_LAYERS, N_CLASSES = 64, 32, 3, 10

    key = jax.random.PRNGKey(0)
    key_x1, key_x2, key_p = jax.random.split(key, 3)

    params = init_mlp_params(key_p, INPUT_SIZE, N_CLASSES,
                             hidden_dim=HIDDEN_DIM, num_layers=NUM_LAYERS,
                             use_bias=True)
    prepped = prepare_params(params)          # one-time weight pad/cast

    # Case 1: tiny batch (single grid step, block == full batch dim, no pad).
    x1 = jax.random.normal(key_x1, (2, INPUT_SIZE), dtype=jnp.float32)
    out1 = jax.block_until_ready(mlp_forward(prepped, x1, activation_fn="relu"))

    # Case 2: batch not a multiple of the tile -> exercises batch padding and a
    # multi-step "parallel" grid (>= 2 steps for v7x's two TensorCores).
    x2 = jax.random.normal(key_x2, (40, INPUT_SIZE), dtype=jnp.float32)
    out2 = jax.block_until_ready(mlp_forward(prepped, x2, activation_fn="relu"))

    ok = True
    for x, out in ((x1, out1), (x2, out2)):
        ref = _ref_forward(params, x, "relu")
        ok &= out.shape == (x.shape[0], N_CLASSES)
        ok &= bool(jnp.allclose(out, ref, atol=1e-2, rtol=1e-2))
    assert ok

    print("KERNEL_OK")
</pallas_src>

<mosaic_0001>
module attributes {stable_mosaic.version = 11 : i64} {
  func.func @kernel(%arg0: i32, %arg1: memref<2x64xf32, #tpu.memory_space<vmem>>, %arg2: memref<64x128xbf16, #tpu.memory_space<vmem>>, %arg3: memref<1x128xf32, #tpu.memory_space<vmem>>, %arg4: memref<128x128xbf16, #tpu.memory_space<vmem>>, %arg5: memref<1x128xf32, #tpu.memory_space<vmem>>, %arg6: memref<128x128xbf16, #tpu.memory_space<vmem>>, %arg7: memref<1x128xf32, #tpu.memory_space<vmem>>, %arg8: memref<128x128xbf16, #tpu.memory_space<vmem>>, %arg9: memref<1x128xf32, #tpu.memory_space<vmem>>, %arg10: memref<2x128xf32, #tpu.memory_space<vmem>>) attributes {dimension_semantics = [#tpu.dimension_semantics<parallel>], iteration_bounds = array<i64: 1>, scalar_prefetch = 0 : i64, scratch_operands = 0 : i64, tpu.core_type = #tpu.core_type<tc>, window_params = [{transform_indices = @transform_0, window_bounds = array<i64: 2, 64>}, {pipeline_mode = #tpu.pipeline_mode<synchronous>, transform_indices = @transform_1, window_bounds = array<i64: 64, 128>}, {pipeline_mode = #tpu.pipeline_mode<synchronous>, transform_indices = @transform_2, window_bounds = array<i64: 1, 128>}, {pipeline_mode = #tpu.pipeline_mode<synchronous>, transform_indices = @transform_3, window_bounds = array<i64: 128, 128>}, {pipeline_mode = #tpu.pipeline_mode<synchronous>, transform_indices = @transform_4, window_bounds = array<i64: 1, 128>}, {pipeline_mode = #tpu.pipeline_mode<synchronous>, transform_indices = @transform_5, window_bounds = array<i64: 128, 128>}, {pipeline_mode = #tpu.pipeline_mode<synchronous>, transform_indices = @transform_6, window_bounds = array<i64: 1, 128>}, {pipeline_mode = #tpu.pipeline_mode<synchronous>, transform_indices = @transform_7, window_bounds = array<i64: 128, 128>}, {pipeline_mode = #tpu.pipeline_mode<synchronous>, transform_indices = @transform_8, window_bounds = array<i64: 1, 128>}, {transform_indices = @transform_9, window_bounds = array<i64: 2, 128>}]} {
    %c0 = arith.constant 0 : index
    %c0_0 = arith.constant 0 : index
    %0 = vector.load %arg1[%c0, %c0_0] : memref<2x64xf32, #tpu.memory_space<vmem>>, vector<2x64xf32>
    %1 = arith.truncf %0 : vector<2x64xf32> to vector<2x64xbf16>
    %c0_1 = arith.constant 0 : index
    %c0_2 = arith.constant 0 : index
    %2 = vector.load %arg2[%c0_1, %c0_2] : memref<64x128xbf16, #tpu.memory_space<vmem>>, vector<64x128xbf16>
    %cst = arith.constant dense<0.000000e+00> : vector<2x128xf32>
    %3 = tpu.matmul %1, %2, %cst {dimension_numbers = #tpu.dot_dimension_numbers<[1], [0], [0], [1], [0, 0, 1, 1], [], []>} : vector<2x64xbf16>, vector<64x128xbf16>, vector<2x128xf32> -> vector<2x128xf32>
    %c0_3 = arith.constant 0 : index
    %c0_4 = arith.constant 0 : index
    %4 = vector.load %arg3[%c0_3, %c0_4] : memref<1x128xf32, #tpu.memory_space<vmem>>, vector<1x128xf32>
    %5 = vector.broadcast %4 : vector<1x128xf32> to vector<2x128xf32>
    %6 = arith.addf %3, %5 : vector<2x128xf32>
    %cst_5 = arith.constant 0.000000e+00 : f32
    %7 = vector.broadcast %cst_5 : f32 to vector<2x128xf32>
    %8 = arith.maximumf %6, %7 : vector<2x128xf32>
    %9 = arith.truncf %8 : vector<2x128xf32> to vector<2x128xbf16>
    %c0_6 = arith.constant 0 : index
    %c0_7 = arith.constant 0 : index
    %10 = vector.load %arg4[%c0_6, %c0_7] : memref<128x128xbf16, #tpu.memory_space<vmem>>, vector<128x128xbf16>
    %cst_8 = arith.constant dense<0.000000e+00> : vector<2x128xf32>
    %11 = tpu.matmul %9, %10, %cst_8 {dimension_numbers = #tpu.dot_dimension_numbers<[1], [0], [0], [1], [0, 0, 1, 1], [], []>} : vector<2x128xbf16>, vector<128x128xbf16>, vector<2x128xf32> -> vector<2x128xf32>
    %c0_9 = arith.constant 0 : index
    %c0_10 = arith.constant 0 : index
    %12 = vector.load %arg5[%c0_9, %c0_10] : memref<1x128xf32, #tpu.memory_space<vmem>>, vector<1x128xf32>
    %13 = vector.broadcast %12 : vector<1x128xf32> to vector<2x128xf32>
    %14 = arith.addf %11, %13 : vector<2x128xf32>
    %cst_11 = arith.constant 0.000000e+00 : f32
    %15 = vector.broadcast %cst_11 : f32 to vector<2x128xf32>
    %16 = arith.maximumf %14, %15 : vector<2x128xf32>
    %17 = arith.truncf %16 : vector<2x128xf32> to vector<2x128xbf16>
    %c0_12 = arith.constant 0 : index
    %c0_13 = arith.constant 0 : index
    %18 = vector.load %arg6[%c0_12, %c0_13] : memref<128x128xbf16, #tpu.memory_space<vmem>>, vector<128x128xbf16>
    %cst_14 = arith.constant dense<0.000000e+00> : vector<2x128xf32>
    %19 = tpu.matmul %17, %18, %cst_14 {dimension_numbers = #tpu.dot_dimension_numbers<[1], [0], [0], [1], [0, 0, 1, 1], [], []>} : vector<2x128xbf16>, vector<128x128xbf16>, vector<2x128xf32> -> vector<2x128xf32>
    %c0_15 = arith.constant 0 : index
    %c0_16 = arith.constant 0 : index
    %20 = vector.load %arg7[%c0_15, %c0_16] : memref<1x128xf32, #tpu.memory_space<vmem>>, vector<1x128xf32>
    %21 = vector.broadcast %20 : vector<1x128xf32> to vector<2x128xf32>
    %22 = arith.addf %19, %21 : vector<2x128xf32>
    %cst_17 = arith.constant 0.000000e+00 : f32
    %23 = vector.broadcast %cst_17 : f32 to vector<2x128xf32>
    %24 = arith.maximumf %22, %23 : vector<2x128xf32>
    %25 = arith.truncf %24 : vector<2x128xf32> to vector<2x128xbf16>
    %c0_18 = arith.constant 0 : index
    %c0_19 = arith.constant 0 : index
    %26 = vector.load %arg8[%c0_18, %c0_19] : memref<128x128xbf16, #tpu.memory_space<vmem>>, vector<128x128xbf16>
    %cst_20 = arith.constant dense<0.000000e+00> : vector<2x128xf32>
    %27 = tpu.matmul %25, %26, %cst_20 {dimension_numbers = #tpu.dot_dimension_numbers<[1], [0], [0], [1], [0, 0, 1, 1], [], []>} : vector<2x128xbf16>, vector<128x128xbf16>, vector<2x128xf32> -> vector<2x128xf32>
    %c0_21 = arith.constant 0 : index
    %c0_22 = arith.constant 0 : index
    %28 = vector.load %arg9[%c0_21, %c0_22] : memref<1x128xf32, #tpu.memory_space<vmem>>, vector<1x128xf32>
    %29 = vector.broadcast %28 : vector<1x128xf32> to vector<2x128xf32>
    %30 = arith.addf %27, %29 : vector<2x128xf32>
    %c0_23 = arith.constant 0 : index
    %c0_24 = arith.constant 0 : index
    %31 = vector.load %arg10[%c0_23, %c0_24] : memref<2x128xf32, #tpu.memory_space<vmem>>, vector<2x128xf32>
    tpu.vector_store %arg10[%c0_23, %c0_24], %30 {strides = array<i32>} : memref<2x128xf32, #tpu.memory_space<vmem>>, vector<2x128xf32>,
    return
  }
  func.func @transform_0(%arg0: i32) -> (i32, i32) {
    %c0_i32 = arith.constant 0 : i32
    %c0_i32_0 = arith.constant 0 : i32
    return %arg0, %c0_i32 : i32, i32
  }
  func.func @transform_1(%arg0: i32) -> (i32, i32) {
    %c0_i32 = arith.constant 0 : i32
    %c0_i32_0 = arith.constant 0 : i32
    %c0_i32_1 = arith.constant 0 : i32
    return %c0_i32, %c0_i32_0 : i32, i32
  }
  func.func @transform_2(%arg0: i32) -> (i32, i32) {
    %c0_i32 = arith.constant 0 : i32
    %c0_i32_0 = arith.constant 0 : i32
    %c0_i32_1 = arith.constant 0 : i32
    return %c0_i32, %c0_i32_0 : i32, i32
  }
  func.func @transform_3(%arg0: i32) -> (i32, i32) {
    %c0_i32 = arith.constant 0 : i32
    %c0_i32_0 = arith.constant 0 : i32
    %c0_i32_1 = arith.constant 0 : i32
    return %c0_i32, %c0_i32_0 : i32, i32
  }
  func.func @transform_4(%arg0: i32) -> (i32, i32) {
    %c0_i32 = arith.constant 0 : i32
    %c0_i32_0 = arith.constant 0 : i32
    %c0_i32_1 = arith.constant 0 : i32
    return %c0_i32, %c0_i32_0 : i32, i32
  }
  func.func @transform_5(%arg0: i32) -> (i32, i32) {
    %c0_i32 = arith.constant 0 : i32
    %c0_i32_0 = arith.constant 0 : i32
    %c0_i32_1 = arith.constant 0 : i32
    return %c0_i32, %c0_i32_0 : i32, i32
  }
  func.func @transform_6(%arg0: i32) -> (i32, i32) {
    %c0_i32 = arith.constant 0 : i32
    %c0_i32_0 = arith.constant 0 : i32
    %c0_i32_1 = arith.constant 0 : i32
    return %c0_i32, %c0_i32_0 : i32, i32
  }
  func.func @transform_7(%arg0: i32) -> (i32, i32) {
    %c0_i32 = arith.constant 0 : i32
    %c0_i32_0 = arith.constant 0 : i32
    %c0_i32_1 = arith.constant 0 : i32
    return %c0_i32, %c0_i32_0 : i32, i32
  }
  func.func @transform_8(%arg0: i32) -> (i32, i32) {
    %c0_i32 = arith.constant 0 : i32
    %c0_i32_0 = arith.constant 0 : i32
    %c0_i32_1 = arith.constant 0 : i32
    return %c0_i32, %c0_i32_0 : i32, i32
  }
  func.func @transform_9(%arg0: i32) -> (i32, i32) {
    %c0_i32 = arith.constant 0 : i32
    %c0_i32_0 = arith.constant 0 : i32
    return %arg0, %c0_i32 : i32, i32
  }
}

module attributes {stable_mosaic.version = 11 : i64} {
  func.func @kernel(%arg0: i32, %arg1: memref<2x64xf32, #tpu.memory_space<vmem>>, %arg2: memref<64x128xbf16, #tpu.memory_space<vmem>>, %arg3: memref<1x128xf32, #tpu.memory_space<vmem>>, %arg4: memref<128x128xbf16, #tpu.memory_space<vmem>>, %arg5: memref<1x128xf32, #tpu.memory_space<vmem>>, %arg6: memref<128x128xbf16, #tpu.memory_space<vmem>>, %arg7: memref<1x128xf32, #tpu.memory_space<vmem>>, %arg8: memref<128x128xbf16, #tpu.memory_space<vmem>>, %arg9: memref<1x128xf32, #tpu.memory_space<vmem>>, %arg10: memref<2x128xf32, #tpu.memory_space<vmem>>) attributes {dimension_semantics = [#tpu.dimension_semantics<parallel>], iteration_bounds = array<i64: 1>, scalar_prefetch = 0 : i64, scratch_operands = 0 : i64, tpu.core_type = #tpu.core_type<tc>, window_params = [{transform_indices = @transform_0, window_bounds = array<i64: 2, 64>}, {pipeline_mode = #tpu.pipeline_mode<synchronous>, transform_indices = @transform_1, window_bounds = array<i64: 64, 128>}, {pipeline_mode = #tpu.pipeline_mode<synchronous>, transform_indices = @transform_2, window_bounds = array<i64: 1, 128>}, {pipeline_mode = #tpu.pipeline_mode<synchronous>, transform_indices = @transform_3, window_bounds = array<i64: 128, 128>}, {pipeline_mode = #tpu.pipeline_mode<synchronous>, transform_indices = @transform_4, window_bounds = array<i64: 1, 128>}, {pipeline_mode = #tpu.pipeline_mode<synchronous>, transform_indices = @transform_5, window_bounds = array<i64: 128, 128>}, {pipeline_mode = #tpu.pipeline_mode<synchronous>, transform_indices = @transform_6, window_bounds = array<i64: 1, 128>}, {pipeline_mode = #tpu.pipeline_mode<synchronous>, transform_indices = @transform_7, window_bounds = array<i64: 128, 128>}, {pipeline_mode = #tpu.pipeline_mode<synchronous>, transform_indices = @transform_8, window_bounds = array<i64: 1, 128>}, {transform_indices = @transform_9, window_bounds = array<i64: 2, 128>}]} {
    %c0 = arith.constant 0 : index
    %c0_0 = arith.constant 0 : index
    %0 = vector.load %arg1[%c0, %c0_0] : memref<2x64xf32, #tpu.memory_space<vmem>>, vector<2x64xf32>
    %1 = arith.truncf %0 : vector<2x64xf32> to vector<2x64xbf16>
    %c0_1 = arith.constant 0 : index
    %c0_2 = arith.constant 0 : index
    %2 = vector.load %arg2[%c0_1, %c0_2] : memref<64x128xbf16, #tpu.memory_space<vmem>>, vector<64x128xbf16>
    %cst = arith.constant dense<0.000000e+00> : vector<2x128xf32>
    %3 = tpu.matmul %1, %2, %cst {dimension_numbers = #tpu.dot_dimension_numbers<[1], [0], [0], [1], [0, 0, 1, 1], [], []>} : vector<2x64xbf16>, vector<64x128xbf16>, vector<2x128xf32> -> vector<2x128xf32>
    %c0_3 = arith.constant 0 : index
    %c0_4 = arith.constant 0 : index
    %4 = vector.load %arg3[%c0_3, %c0_4] : memref<1x128xf32, #tpu.memory_space<vmem>>, vector<1x128xf32>
    %5 = vector.broadcast %4 : vector<1x128xf32> to vector<2x128xf32>
    %6 = arith.addf %3, %5 : vector<2x128xf32>
    %cst_5 = arith.constant 0.000000e+00 : f32
    %7 = vector.broadcast %cst_5 : f32 to vector<2x128xf32>
    %8 = arith.maximumf %6, %7 : vector<2x128xf32>
    %9 = arith.truncf %8 : vector<2x128xf32> to vector<2x128xbf16>
    %c0_6 = arith.constant 0 : index
    %c0_7 = arith.constant 0 : index
    %10 = vector.load %arg4[%c0_6, %c0_7] : memref<128x128xbf16, #tpu.memory_space<vmem>>, vector<128x128xbf16>
    %cst_8 = arith.constant dense<0.000000e+00> : vector<2x128xf32>
    %11 = tpu.matmul %9, %10, %cst_8 {dimension_numbers = #tpu.dot_dimension_numbers<[1], [0], [0], [1], [0, 0, 1, 1], [], []>} : vector<2x128xbf16>, vector<128x128xbf16>, vector<2x128xf32> -> vector<2x128xf32>
    %c0_9 = arith.constant 0 : index
    %c0_10 = arith.constant 0 : index
    %12 = vector.load %arg5[%c0_9, %c0_10] : memref<1x128xf32, #tpu.memory_space<vmem>>, vector<1x128xf32>
    %13 = vector.broadcast %12 : vector<1x128xf32> to vector<2x128xf32>
    %14 = arith.addf %11, %13 : vector<2x128xf32>
    %cst_11 = arith.constant 0.000000e+00 : f32
    %15 = vector.broadcast %cst_11 : f32 to vector<2x128xf32>
    %16 = arith.maximumf %14, %15 : vector<2x128xf32>
    %17 = arith.truncf %16 : vector<2x128xf32> to vector<2x128xbf16>
    %c0_12 = arith.constant 0 : index
    %c0_13 = arith.constant 0 : index
    %18 = vector.load %arg6[%c0_12, %c0_13] : memref<128x128xbf16, #tpu.memory_space<vmem>>, vector<128x128xbf16>
    %cst_14 = arith.constant dense<0.000000e+00> : vector<2x128xf32>
    %19 = tpu.matmul %17, %18, %cst_14 {dimension_numbers = #tpu.dot_dimension_numbers<[1], [0], [0], [1], [0, 0, 1, 1], [], []>} : vector<2x128xbf16>, vector<128x128xbf16>, vector<2x128xf32> -> vector<2x128xf32>
    %c0_15 = arith.constant 0 : index
    %c0_16 = arith.constant 0 : index
    %20 = vector.load %arg7[%c0_15, %c0_16] : memref<1x128xf32, #tpu.memory_space<vmem>>, vector<1x128xf32>
    %21 = vector.broadcast %20 : vector<1x128xf32> to vector<2x128xf32>
    %22 = arith.addf %19, %21 : vector<2x128xf32>
    %cst_17 = arith.constant 0.000000e+00 : f32
    %23 = vector.broadcast %cst_17 : f32 to vector<2x128xf32>
    %24 = arith.maximumf %22, %23 : vector<2x128xf32>
    %25 = arith.truncf %24 : vector<2x128xf32> to vector<2x128xbf16>
    %c0_18 = arith.constant 0 : index
    %c0_19 = arith.constant 0 : index
    %26 = vector.load %arg8[%c0_18, %c0_19] : memref<128x128xbf16, #tpu.memory_space<vmem>>, vector<128x128xbf16>
    %cst_20 = arith.constant dense<0.000000e+00> : vector<2x128xf32>
    %27 = tpu.matmul %25, %26, %cst_20 {dimension_numbers = #tpu.dot_dimension_numbers<[1], [0], [0], [1], [0, 0, 1, 1], [], []>} : vector<2x128xbf16>, vector<128x128xbf16>, vector<2x128xf32> -> vector<2x128xf32>
    %c0_21 = arith.constant 0 : index
    %c0_22 = arith.constant 0 : index
    %28 = vector.load %arg9[%c0_21, %c0_22] : memref<1x128xf32, #tpu.memory_space<vmem>>, vector<1x128xf32>
    %29 = vector.broadcast %28 : vector<1x128xf32> to vector<2x128xf32>
    %30 = arith.addf %27, %29 : vector<2x128xf32>
    %c0_23 = arith.constant 0 : index
    %c0_24 = arith.constant 0 : index
    %31 = vector.load %arg10[%c0_23, %c0_24] : memref<2x128xf32, #tpu.memory_space<vmem>>, vector<2x128xf32>
    tpu.vector_store %arg10[%c0_23, %c0_24], %30 {strides = array<i32>} : memref<2x128xf32, #tpu.memory_space<vmem>>, vector<2x128xf32>,
    return
  }
  func.func @transform_0(%arg0: i32) -> (i32, i32) {
    %c0_i32 = arith.constant 0 : i32
    %c0_i32_0 = arith.constant 0 : i32
    return %arg0, %c0_i32 : i32, i32
  }
  func.func @transform_1(%arg0: i32) -> (i32, i32) {
    %c0_i32 = arith.constant 0 : i32
    %c0_i32_0 = arith.constant 0 : i32
    %c0_i32_1 = arith.constant 0 : i32
    return %c0_i32, %c0_i32_0 : i32, i32
  }
  func.func @transform_2(%arg0: i32) -> (i32, i32) {
    %c0_i32 = arith.constant 0 : i32
    %c0_i32_0 = arith.constant 0 : i32
    %c0_i32_1 = arith.constant 0 : i32
    return %c0_i32, %c0_i32_0 : i32, i32
  }
  func.func @transform_3(%arg0: i32) -> (i32, i32) {
    %c0_i32 = arith.constant 0 : i32
    %c0_i32_0 = arith.constant 0 : i32
    %c0_i32_1 = arith.constant 0 : i32
    return %c0_i32, %c0_i32_0 : i32, i32
  }
  func.func @transform_4(%arg0: i32) -> (i32, i32) {
    %c0_i32 = arith.constant 0 : i32
    %c0_i32_0 = arith.constant 0 : i32
    %c0_i32_1 = arith.constant 0 : i32
    return %c0_i32, %c0_i32_0 : i32, i32
  }
  func.func @transform_5(%arg0: i32) -> (i32, i32) {
    %c0_i32 = arith.constant 0 : i32
    %c0_i32_0 = arith.constant 0 : i32
    %c0_i32_1 = arith.constant 0 : i32
    return %c0_i32, %c0_i32_0 : i32, i32
  }
  func.func @transform_6(%arg0: i32) -> (i32, i32) {
    %c0_i32 = arith.constant 0 : i32
    %c0_i32_0 = arith.constant 0 : i32
    %c0_i32_1 = arith.constant 0 : i32
    return %c0_i32, %c0_i32_0 : i32, i32
  }
  func.func @transform_7(%arg0: i32) -> (i32, i32) {
    %c0_i32 = arith.constant 0 : i32
    %c0_i32_0 = arith.constant 0 : i32
    %c0_i32_1 = arith.constant 0 : i32
    return %c0_i32, %c0_i32_0 : i32, i32
  }
  func.func @transform_8(%arg0: i32) -> (i32, i32) {
    %c0_i32 = arith.constant 0 : i32
    %c0_i32_0 = arith.constant 0 : i32
    %c0_i32_1 = arith.constant 0 : i32
    return %c0_i32, %c0_i32_0 : i32, i32
  }
  func.func @transform_9(%arg0: i32) -> (i32, i32) {
    %c0_i32 = arith.constant 0 : i32
    %c0_i32_0 = arith.constant 0 : i32
    return %arg0, %c0_i32 : i32, i32
  }
}

</mosaic_0001>

<llo_original>
// kernel: _mlp_forward_impl.1
$region0: #{_mlp_forward_impl.1}
  #allocation0 [shape = 'u32[]', space=smem, size = 0x4, offset = 0x4, fixed_abs, tag = 'smem constant byte address 0x4 - core index']
  #allocation1 [shape = 'u32[72,128]{1,0:T(1,128)}', space=vmem, size = 0x9000, scoped, tag = 'internal scratch']
  %s0 = inlined_call_operand.vmem [shape: f32[2,64], index: 0, kind: input, shape index: {}]
  %s1 = inlined_call_operand.hbm [shape: bf16[64,128], index: 1, kind: input, shape index: {}]
  %s2 = inlined_call_operand.vmem [shape: f32[1,128], index: 2, kind: input, shape index: {}]
  %s3 = inlined_call_operand.hbm [shape: bf16[128,128], index: 3, kind: input, shape index: {}]
  %s4 = inlined_call_operand.vmem [shape: f32[1,128], index: 4, kind: input, shape index: {}]
  %s5 = inlined_call_operand.hbm [shape: bf16[128,128], index: 5, kind: input, shape index: {}]
  %s6 = inlined_call_operand.vmem [shape: f32[1,128], index: 6, kind: input, shape index: {}]
  %s7 = inlined_call_operand.hbm [shape: bf16[128,128], index: 7, kind: input, shape index: {}]
  %s8 = inlined_call_operand.vmem [shape: f32[1,128], index: 8, kind: input, shape index: {}]
  %s9 = inlined_call_operand.hbm [shape: f32[2,128], index: 9, kind: output, shape index: {}]
  %s10 = sld [smem:[#allocation0]]
  $region62: #{_mlp_forward_impl.1} parent=0
    _
  %s12 = ssub.s32 1, %s10
  %s13 = scalar_select 0, %s12, %s10
  $region1: #{_mlp_forward_impl.1} parent=0
    #allocation2 [shape = 'u8[16384]{0}', space=vmem, size = 0x4000, scoped, tag = 'input window, operand 1, single buffered']
    #allocation3 [shape = 's32[1]{0}', space=sflag, size = 0x4, scoped, tag = 'scoped memory for _mlp_forward_impl.1']
    #allocation4 [shape = 's32[1]{0}', space=sflag, size = 0x4, scoped, tag = 'scoped memory for _mlp_forward_impl.1']
    #allocation5 [shape = 'u8[32768]{0}', space=vmem, size = 0x8000, scoped, tag = 'input window, operand 3, single buffered']
    #allocation6 [shape = 's32[1]{0}', space=sflag, size = 0x4, scoped, tag = 'scoped memory for _mlp_forward_impl.1']
    #allocation7 [shape = 'u8[32768]{0}', space=vmem, size = 0x8000, scoped, tag = 'input window, operand 5, single buffered']
    #allocation8 [shape = 'u8[32768]{0}', space=vmem, size = 0x8000, scoped, tag = 'input window, operand 7, single buffered']
    #allocation9 [shape = 's32[1]{0}', space=sflag, size = 0x4, scoped, tag = 'scoped memory for _mlp_forward_impl.1']
    #allocation10 [shape = 'u8[1024]{0}', space=vmem, size = 0x400, scoped, tag = 'output window, operand 0, single buffered']
    %14 = vsyncpa [#allocation3], 0
    %15 = vsyncpa [#allocation6], 0
    %16 = vsyncpa [#allocation9], 0
    %17 = vsyncpa [#allocation4], 0
    // Predicated region
    $region2: #{_mlp_forward_impl.1} parent=1 // pred_check
      _
    $region3: #{_mlp_forward_impl.1} parent=1 // pred_check_branch
      %19 = sbr.rel (0) target = $region5
    $region4: #{_mlp_forward_impl.1} parent=1 // pred_region
      _
    $region5: #{_mlp_forward_impl.1} parent=1 // pred_fallthru
      _
    // Predicated region
    $region6: #{_mlp_forward_impl.1} parent=1 // pred_check
      _
    $region7: #{_mlp_forward_impl.1} parent=1 // pred_check_branch
      %21 = sbr.rel (0) target = $region9
    $region8: #{_mlp_forward_impl.1} parent=1 // pred_region
      %23 = vsyncadd [#allocation3], 0
      %s24 = sshll.u32 %s1, 4
      %s25 = int_to_ptr.hbm [resolvable:$true] %s24
      %s26 = sshll.u32 [#allocation2], 4
      %s27 = int_to_ptr.vmem [resolvable:$true] %s26
      %32 = dma.hbm_to_vmem [thread:$0]  %s25, 512, %s27, [#allocation3], 64, 64, 4
    $region9: #{_mlp_forward_impl.1} parent=1 // pred_fallthru
      _
    // Predicated region
    $region10: #{_mlp_forward_impl.1} parent=1 // pred_check
      _
    $region11: #{_mlp_forward_impl.1} parent=1 // pred_check_branch
      %34 = sbr.rel (0) target = $region13
    $region12: #{_mlp_forward_impl.1} parent=1 // pred_region
      _
    $region13: #{_mlp_forward_impl.1} parent=1 // pred_fallthru
      _
    // Predicated region
    $region14: #{_mlp_forward_impl.1} parent=1 // pred_check
      _
    $region15: #{_mlp_forward_impl.1} parent=1 // pred_check_branch
      %36 = sbr.rel (0) target = $region17
    $region16: #{_mlp_forward_impl.1} parent=1 // pred_region
      %38 = vsyncadd [#allocation6], 0
      %s39 = sshll.u32 %s3, 4
      %s40 = int_to_ptr.hbm [resolvable:$true] %s39
      %s41 = sshll.u32 [#allocation5], 4
      %s42 = int_to_ptr.vmem [resolvable:$true] %s41
      %47 = dma.hbm_to_vmem [thread:$0]  %s40, 1024, %s42, [#allocation6], 64, 64, 4
    $region17: #{_mlp_forward_impl.1} parent=1 // pred_fallthru
      _
    // Predicated region
    $region18: #{_mlp_forward_impl.1} parent=1 // pred_check
      _
    $region19: #{_mlp_forward_impl.1} parent=1 // pred_check_branch
      %49 = sbr.rel (0) target = $region21
    $region20: #{_mlp_forward_impl.1} parent=1 // pred_region
      _
    $region21: #{_mlp_forward_impl.1} parent=1 // pred_fallthru
      _
    // Predicated region
    $region22: #{_mlp_forward_impl.1} parent=1 // pred_check
      _
    $region23: #{_mlp_forward_impl.1} parent=1 // pred_check_branch
      %51 = sbr.rel (0) target = $region25
    $region24: #{_mlp_forward_impl.1} parent=1 // pred_region
      %53 = vsyncadd [#allocation6], 0
      %s54 = sshll.u32 %s5, 4
      %s55 = int_to_ptr.hbm [resolvable:$true] %s54
      %s56 = sshll.u32 [#allocation7], 4
      %s57 = int_to_ptr.vmem [resolvable:$true] %s56
      %62 = dma.hbm_to_vmem [thread:$0]  %s55, 1024, %s57, [#allocation6], 64, 64, 4
    $region25: #{_mlp_forward_impl.1} parent=1 // pred_fallthru
      _
    // Predicated region
    $region26: #{_mlp_forward_impl.1} parent=1 // pred_check
      _
    $region27: #{_mlp_forward_impl.1} parent=1 // pred_check_branch
      %64 = sbr.rel (0) target = $region29
    $region28: #{_mlp_forward_impl.1} parent=1 // pred_region
      _
    $region29: #{_mlp_forward_impl.1} parent=1 // pred_fallthru
      _
    // Predicated region
    $region30: #{_mlp_forward_impl.1} parent=1 // pred_check
      _
    $region31: #{_mlp_forward_impl.1} parent=1 // pred_check_branch
      %66 = sbr.rel (0) target = $region33
    $region32: #{_mlp_forward_impl.1} parent=1 // pred_region
      %68 = vsyncadd [#allocation9], 0
      %s69 = sshll.u32 %s7, 4
      %s70 = int_to_ptr.hbm [resolvable:$true] %s69
      %s71 = sshll.u32 [#allocation8], 4
      %s72 = int_to_ptr.vmem [resolvable:$true] %s71
      %77 = dma.hbm_to_vmem [thread:$0]  %s70, 1024, %s72, [#allocation9], 64, 64, 4
    $region33: #{_mlp_forward_impl.1} parent=1 // pred_fallthru
      _
    // Predicated region
    $region34: #{_mlp_forward_impl.1} parent=1 // pred_check
      _
    $region35: #{_mlp_forward_impl.1} parent=1 // pred_check_branch
      %79 = sbr.rel (0) target = $region37
    $region36: #{_mlp_forward_impl.1} parent=1 // pred_region
      _
    $region37: #{_mlp_forward_impl.1} parent=1 // pred_fallthru
      _
    // Predicated region
    $region38: #{_mlp_forward_impl.1} parent=1 // pred_check
      _
    $region39: #{_mlp_forward_impl.1} parent=1 // pred_check_branch
      %81 = sbr.rel (0) target = $region41
    $region40: #{_mlp_forward_impl.1} parent=1 // pred_region
      %83 = dma.done [#allocation3], 512
    $region41: #{_mlp_forward_impl.1} parent=1 // pred_fallthru
      _
    // Predicated region
    $region42: #{_mlp_forward_impl.1} parent=1 // pred_check
      _
    $region43: #{_mlp_forward_impl.1} parent=1 // pred_check_branch
      %85 = sbr.rel (0) target = $region45
    $region44: #{_mlp_forward_impl.1} parent=1 // pred_region
      %87 = dma.done [#allocation6], 1024
    $region45: #{_mlp_forward_impl.1} parent=1 // pred_fallthru
      _
    // Predicated region
    $region46: #{_mlp_forward_impl.1} parent=1 // pred_check
      _
    $region47: #{_mlp_forward_impl.1} parent=1 // pred_check_branch
      %89 = sbr.rel (0) target = $region49
    $region48: #{_mlp_forward_impl.1} parent=1 // pred_region
      %91 = dma.done [#allocation6], 1024
    $region49: #{_mlp_forward_impl.1} parent=1 // pred_fallthru
      _
    // Predicated region
    $region50: #{_mlp_forward_impl.1} parent=1 // pred_check
      _
    $region51: #{_mlp_forward_impl.1} parent=1 // pred_check_branch
      %93 = sbr.rel (0) target = $region53
    $region52: #{_mlp_forward_impl.1} parent=1 // pred_region
      %95 = dma.done [#allocation9], 1024
    $region53: #{_mlp_forward_impl.1} parent=1 // pred_fallthru
      _
    %v97 = vld [vmem:[%s0] sm:$0x3]
    %v98 = vpack.c.bf16 %v97, %v97
    %v99 = vld [vmem:[#allocation2] sm:$0xf]
    %v100 = vld [vmem:[#allocation2 + $0x4] sm:$0xf]
    %v101 = vld [vmem:[#allocation2 + $0x8] sm:$0xf]
    %v102 = vld [vmem:[#allocation2 + $0xc] sm:$0xf]
    %v103 = vld [vmem:[#allocation2 + $0x10] sm:$0xf]
    %v104 = vld [vmem:[#allocation2 + $0x14] sm:$0xf]
    %v105 = vld [vmem:[#allocation2 + $0x18] sm:$0xf]
    %v106 = vld [vmem:[#allocation2 + $0x1c] sm:$0xf]
    %v107 = vld [vmem:[%s2] sm:$0x1]
    %v109 = vperm.slane %v107, 0
    %v119 = vunpack.c.l.b16 %v99
    %v120 = vunpack.c.l.b16 %v100
    %v121 = vunpack.c.l.b16 %v101
    %v122 = vunpack.c.l.b16 %v102
    %v123 = vunpack.c.l.b16 %v103
    %v124 = vunpack.c.l.b16 %v104
    %v125 = vunpack.c.l.b16 %v105
    %v126 = vunpack.c.l.b16 %v106
    %v127 = vpack.c.b16 %v120, %v119
    %v128 = vpack.c.b16 %v122, %v121
    %v129 = vpack.c.b16 %v124, %v123
    %v130 = vpack.c.b16 %v126, %v125
    %vm135 = vcmask 523264
    %v137 = vsel %vm135, %v98, 0
    %139 = vmatpush.bf16.msra.mxu0 0
    %140 = vmatpush.bf16.msra.mxu0 0
    %141 = vmatpush.bf16.msra.mxu0 0
    %142 = vmatpush.bf16.msra.mxu0 0
    %143 = vmatpush.bf16.msra.mxu0 %v130
    %144 = vmatpush.bf16.msra.mxu0 %v129
    %145 = vmatpush.bf16.msra.mxu0 %v128
    %146 = vmatpush.bf16.msra.mxu0 %v127
    %147 = vmatmul.bf16.gmra.mxu0 %v137
    %v148 = vpop.f32.mrf.mxu0
    %v149 = vadd.f32 %v109, %v148
    %v150 = vpop.f32.mrf.mxu0
    %151 = vdwg.mxu0
    %v152 = vmax.f32 %v149, 0.0
    %v153 = vpack.c.bf16 %v152, %v152
    %v154 = vld [vmem:[#allocation5] sm:$0xf]
    %v155 = vld [vmem:[#allocation5 + $0x4] sm:$0xf]
    %v156 = vld [vmem:[#allocation5 + $0x8] sm:$0xf]
    %v157 = vld [vmem:[#allocation5 + $0xc] sm:$0xf]
    %v158 = vld [vmem:[#allocation5 + $0x10] sm:$0xf]
    %v159 = vld [vmem:[#allocation5 + $0x14] sm:$0xf]
    %v160 = vld [vmem:[#allocation5 + $0x18] sm:$0xf]
    %v161 = vld [vmem:[#allocation5 + $0x1c] sm:$0xf]
    %v162 = vld [vmem:[#allocation5 + $0x20] sm:$0xf]
    %v163 = vld [vmem:[#allocation5 + $0x24] sm:$0xf]
    %v164 = vld [vmem:[#allocation5 + $0x28] sm:$0xf]
    %v165 = vld [vmem:[#allocation5 + $0x2c] sm:$0xf]
    %v166 = vld [vmem:[#allocation5 + $0x30] sm:$0xf]
    %v167 = vld [vmem:[#allocation5 + $0x34] sm:$0xf]
    %v168 = vld [vmem:[#allocation5 + $0x38] sm:$0xf]
    %v169 = vld [vmem:[#allocation5 + $0x3c] sm:$0xf]
    %v170 = vld [vmem:[%s4] sm:$0x1]
    %v172 = vperm.slane %v170, 0
    %v190 = vunpack.c.l.b16 %v154
    %v191 = vunpack.c.l.b16 %v155
    %v192 = vunpack.c.l.b16 %v156
    %v193 = vunpack.c.l.b16 %v157
    %v194 = vunpack.c.l.b16 %v158
    %v195 = vunpack.c.l.b16 %v159
    %v196 = vunpack.c.l.b16 %v160
    %v197 = vunpack.c.l.b16 %v161
    %v198 = vunpack.c.l.b16 %v162
    %v199 = vunpack.c.l.b16 %v163
    %v200 = vunpack.c.l.b16 %v164
    %v201 = vunpack.c.l.b16 %v165
    %v202 = vunpack.c.l.b16 %v166
    %v203 = vunpack.c.l.b16 %v167
    %v204 = vunpack.c.l.b16 %v168
    %v205 = vunpack.c.l.b16 %v169
    %v206 = vpack.c.b16 %v191, %v190
    %v207 = vpack.c.b16 %v193, %v192
    %v208 = vpack.c.b16 %v195, %v194
    %v209 = vpack.c.b16 %v197, %v196
    %v210 = vpack.c.b16 %v199, %v198
    %v211 = vpack.c.b16 %v201, %v200
    %v212 = vpack.c.b16 %v203, %v202
    %v213 = vpack.c.b16 %v205, %v204
    %222 = vmatpush.bf16.msra.mxu0 %v213
    %223 = vmatpush.bf16.msra.mxu0 %v212
    %224 = vmatpush.bf16.msra.mxu0 %v211
    %225 = vmatpush.bf16.msra.mxu0 %v210
    %226 = vmatpush.bf16.msra.mxu0 %v209
    %227 = vmatpush.bf16.msra.mxu0 %v208
    %228 = vmatpush.bf16.msra.mxu0 %v207
    %229 = vmatpush.bf16.msra.mxu0 %v206
    %230 = vmatmul.bf16.gmra.mxu0 %v153
    %v231 = vpop.f32.mrf.mxu0
    %v232 = vadd.f32 %v172, %v231
    %v233 = vpop.f32.mrf.mxu0
    %234 = vdwg.mxu0
    %v235 = vmax.f32 %v232, 0.0
    %v236 = vpack.c.bf16 %v235, %v235
    %v237 = vld [vmem:[#allocation7] sm:$0xf]
    %v238 = vld [vmem:[#allocation7 + $0x4] sm:$0xf]
    %v239 = vld [vmem:[#allocation7 + $0x8] sm:$0xf]
    %v240 = vld [vmem:[#allocation7 + $0xc] sm:$0xf]
    %v241 = vld [vmem:[#allocation7 + $0x10] sm:$0xf]
    %v242 = vld [vmem:[#allocation7 + $0x14] sm:$0xf]
    %v243 = vld [vmem:[#allocation7 + $0x18] sm:$0xf]
    %v244 = vld [vmem:[#allocation7 + $0x1c] sm:$0xf]
    %v245 = vld [vmem:[#allocation7 + $0x20] sm:$0xf]
    %v246 = vld [vmem:[#allocation7 + $0x24] sm:$0xf]
    %v247 = vld [vmem:[#allocation7 + $0x28] sm:$0xf]
    %v248 = vld [vmem:[#allocation7 + $0x2c] sm:$0xf]
    %v249 = vld [vmem:[#allocation7 + $0x30] sm:$0xf]
    %v250 = vld [vmem:[#allocation7 + $0x34] sm:$0xf]
    %v251 = vld [vmem:[#allocation7 + $0x38] sm:$0xf]
    %v252 = vld [vmem:[#allocation7 + $0x3c] sm:$0xf]
    %v253 = vld [vmem:[%s6] sm:$0x1]
    %v255 = vperm.slane %v253, 0
    %v273 = vunpack.c.l.b16 %v237
    %v274 = vunpack.c.l.b16 %v238
    %v275 = vunpack.c.l.b16 %v239
    %v276 = vunpack.c.l.b16 %v240
    %v277 = vunpack.c.l.b16 %v241
    %v278 = vunpack.c.l.b16 %v242
    %v279 = vunpack.c.l.b16 %v243
    %v280 = vunpack.c.l.b16 %v244
    %v281 = vunpack.c.l.b16 %v245
    %v282 = vunpack.c.l.b16 %v246
    %v283 = vunpack.c.l.b16 %v247
    %v284 = vunpack.c.l.b16 %v248
    %v285 = vunpack.c.l.b16 %v249
    %v286 = vunpack.c.l.b16 %v250
    %v287 = vunpack.c.l.b16 %v251
    %v288 = vunpack.c.l.b16 %v252
    %v289 = vpack.c.b16 %v274, %v273
    %v290 = vpack.c.b16 %v276, %v275
    %v291 = vpack.c.b16 %v278, %v277
    %v292 = vpack.c.b16 %v280, %v279
    %v293 = vpack.c.b16 %v282, %v281
    %v294 = vpack.c.b16 %v284, %v283
    %v295 = vpack.c.b16 %v286, %v285
    %v296 = vpack.c.b16 %v288, %v287
    %305 = vmatpush.bf16.msra.mxu0 %v296
    %306 = vmatpush.bf16.msra.mxu0 %v295
    %307 = vmatpush.bf16.msra.mxu0 %v294
    %308 = vmatpush.bf16.msra.mxu0 %v293
    %309 = vmatpush.bf16.msra.mxu0 %v292
    %310 = vmatpush.bf16.msra.mxu0 %v291
    %311 = vmatpush.bf16.msra.mxu0 %v290
    %312 = vmatpush.bf16.msra.mxu0 %v289
    %313 = vmatmul.bf16.gmra.mxu0 %v236
    %v314 = vpop.f32.mrf.mxu0
    %v315 = vadd.f32 %v255, %v314
    %v316 = vpop.f32.mrf.mxu0
    %317 = vdwg.mxu0
    %v318 = vmax.f32 %v315, 0.0
    %v319 = vpack.c.bf16 %v318, %v318
    %v320 = vld [vmem:[#allocation8] sm:$0xf]
    %v321 = vld [vmem:[#allocation8 + $0x4] sm:$0xf]
    %v322 = vld [vmem:[#allocation8 + $0x8] sm:$0xf]
    %v323 = vld [vmem:[#allocation8 + $0xc] sm:$0xf]
    %v324 = vld [vmem:[#allocation8 + $0x10] sm:$0xf]
    %v325 = vld [vmem:[#allocation8 + $0x14] sm:$0xf]
    %v326 = vld [vmem:[#allocation8 + $0x18] sm:$0xf]
    %v327 = vld [vmem:[#allocation8 + $0x1c] sm:$0xf]
    %v328 = vld [vmem:[#allocation8 + $0x20] sm:$0xf]
    %v329 = vld [vmem:[#allocation8 + $0x24] sm:$0xf]
    %v330 = vld [vmem:[#allocation8 + $0x28] sm:$0xf]
    %v331 = vld [vmem:[#allocation8 + $0x2c] sm:$0xf]
    %v332 = vld [vmem:[#allocation8 + $0x30] sm:$0xf]
    %v333 = vld [vmem:[#allocation8 + $0x34] sm:$0xf]
    %v334 = vld [vmem:[#allocation8 + $0x38] sm:$0xf]
    %v335 = vld [vmem:[#allocation8 + $0x3c] sm:$0xf]
    %v336 = vld [vmem:[%s8] sm:$0x1]
    %v338 = vperm.slane %v336, 0
    %v356 = vunpack.c.l.b16 %v320
    %v357 = vunpack.c.l.b16 %v321
    %v358 = vunpack.c.l.b16 %v322
    %v359 = vunpack.c.l.b16 %v323
    %v360 = vunpack.c.l.b16 %v324
    %v361 = vunpack.c.l.b16 %v325
    %v362 = vunpack.c.l.b16 %v326
    %v363 = vunpack.c.l.b16 %v327
    %v364 = vunpack.c.l.b16 %v328
    %v365 = vunpack.c.l.b16 %v329
    %v366 = vunpack.c.l.b16 %v330
    %v367 = vunpack.c.l.b16 %v331
    %v368 = vunpack.c.l.b16 %v332
    %v369 = vunpack.c.l.b16 %v333
    %v370 = vunpack.c.l.b16 %v334
    %v371 = vunpack.c.l.b16 %v335
    %v372 = vpack.c.b16 %v357, %v356
    %v373 = vpack.c.b16 %v359, %v358
    %v374 = vpack.c.b16 %v361, %v360
    %v375 = vpack.c.b16 %v363, %v362
    %v376 = vpack.c.b16 %v365, %v364
    %v377 = vpack.c.b16 %v367, %v366
    %v378 = vpack.c.b16 %v369, %v368
    %v379 = vpack.c.b16 %v371, %v370
    %388 = vmatpush.bf16.msra.mxu0 %v379
    %389 = vmatpush.bf16.msra.mxu0 %v378
    %390 = vmatpush.bf16.msra.mxu0 %v377
    %391 = vmatpush.bf16.msra.mxu0 %v376
    %392 = vmatpush.bf16.msra.mxu0 %v375
    %393 = vmatpush.bf16.msra.mxu0 %v374
    %394 = vmatpush.bf16.msra.mxu0 %v373
    %395 = vmatpush.bf16.msra.mxu0 %v372
    %396 = vmatmul.bf16.gmra.mxu0 %v319
    %v397 = vpop.f32.mrf.mxu0
    %v398 = vadd.f32 %v338, %v397
    %v399 = vpop.f32.mrf.mxu0
    %400 = vdwg.mxu0
    %401 = vst [vmem:[#allocation10] sm:$0x3] %v398
    // Predicated region
    $region54: #{_mlp_forward_impl.1} parent=1 // pred_check
      _
    $region55: #{_mlp_forward_impl.1} parent=1 // pred_check_branch
      %403 = sbr.rel (0) target = $region57
    $region56: #{_mlp_forward_impl.1} parent=1 // pred_region
      %405 = vsyncadd [#allocation4], 0
      %s407 = sshll.u32 [#allocation10], 4
      %s408 = int_to_ptr.vmem [resolvable:$true] %s407
      %s409 = sshll.u32 %s9, 4
      %s410 = int_to_ptr.hbm [resolvable:$true] %s409
      %412 = dma.vmem_to_hbm [thread:$0]  %s408, 32, %s410, [#allocation4]
    $region57: #{_mlp_forward_impl.1} parent=1 // pred_fallthru
      _
    // Predicated region
    $region58: #{_mlp_forward_impl.1} parent=1 // pred_check
      _
    $region59: #{_mlp_forward_impl.1} parent=1 // pred_check_branch
      %414 = sbr.rel (0) target = $region61
    $region60: #{_mlp_forward_impl.1} parent=1 // pred_region
      %416 = dma.done [#allocation4], 32
    $region61: #{_mlp_forward_impl.1} parent=1 // pred_fallthru
      _
    %417 = vsyncpa [#allocation3], 1
    %418 = vsyncpa [#allocation6], 1
    %419 = vsyncpa [#allocation9], 1
    %420 = vsyncpa [#allocation4], 1

// kernel: _mlp_forward_impl.1
$region0: #{_mlp_forward_impl.1}
  #allocation0 [shape = 'u32[]', space=smem, size = 0x4, offset = 0x4, fixed_abs, tag = 'smem constant byte address 0x4 - core index']
  #allocation1 [shape = 'u32[72,128]{1,0:T(1,128)}', space=vmem, size = 0x9000, scoped, tag = 'internal scratch']
  %s0 = inlined_call_operand.vmem [shape: f32[2,64], index: 0, kind: input, shape index: {}]
  %s1 = inlined_call_operand.hbm [shape: bf16[64,128], index: 1, kind: input, shape index: {}]
  %s2 = inlined_call_operand.vmem [shape: f32[1,128], index: 2, kind: input, shape index: {}]
  %s3 = inlined_call_operand.hbm [shape: bf16[128,128], index: 3, kind: input, shape index: {}]
  %s4 = inlined_call_operand.vmem [shape: f32[1,128], index: 4, kind: input, shape index: {}]
  %s5 = inlined_call_operand.hbm [shape: bf16[128,128], index: 5, kind: input, shape index: {}]
  %s6 = inlined_call_operand.vmem [shape: f32[1,128], index: 6, kind: input, shape index: {}]
  %s7 = inlined_call_operand.hbm [shape: bf16[128,128], index: 7, kind: input, shape index: {}]
  %s8 = inlined_call_operand.vmem [shape: f32[1,128], index: 8, kind: input, shape index: {}]
  %s9 = inlined_call_operand.hbm [shape: f32[2,128], index: 9, kind: output, shape index: {}]
  %s10 = sld [smem:[#allocation0]]
  $region62: #{_mlp_forward_impl.1} parent=0
    _
  %s12 = ssub.s32 1, %s10
  %s13 = scalar_select 0, %s12, %s10
  $region1: #{_mlp_forward_impl.1} parent=0
    #allocation2 [shape = 'u8[16384]{0}', space=vmem, size = 0x4000, scoped, tag = 'input window, operand 1, single buffered']
    #allocation3 [shape = 's32[1]{0}', space=sflag, size = 0x4, scoped, tag = 'scoped memory for _mlp_forward_impl.1']
    #allocation4 [shape = 's32[1]{0}', space=sflag, size = 0x4, scoped, tag = 'scoped memory for _mlp_forward_impl.1']
    #allocation5 [shape = 'u8[32768]{0}', space=vmem, size = 0x8000, scoped, tag = 'input window, operand 3, single buffered']
    #allocation6 [shape = 's32[1]{0}', space=sflag, size = 0x4, scoped, tag = 'scoped memory for _mlp_forward_impl.1']
    #allocation7 [shape = 'u8[32768]{0}', space=vmem, size = 0x8000, scoped, tag = 'input window, operand 5, single buffered']
    #allocation8 [shape = 'u8[32768]{0}', space=vmem, size = 0x8000, scoped, tag = 'input window, operand 7, single buffered']
    #allocation9 [shape = 's32[1]{0}', space=sflag, size = 0x4, scoped, tag = 'scoped memory for _mlp_forward_impl.1']
    #allocation10 [shape = 'u8[1024]{0}', space=vmem, size = 0x400, scoped, tag = 'output window, operand 0, single buffered']
    %14 = vsyncpa [#allocation3], 0
    %15 = vsyncpa [#allocation6], 0
    %16 = vsyncpa [#allocation9], 0
    %17 = vsyncpa [#allocation4], 0
    // Predicated region
    $region2: #{_mlp_forward_impl.1} parent=1 // pred_check
      _
    $region3: #{_mlp_forward_impl.1} parent=1 // pred_check_branch
      %19 = sbr.rel (0) target = $region5
    $region4: #{_mlp_forward_impl.1} parent=1 // pred_region
      _
    $region5: #{_mlp_forward_impl.1} parent=1 // pred_fallthru
      _
    // Predicated region
    $region6: #{_mlp_forward_impl.1} parent=1 // pred_check
      _
    $region7: #{_mlp_forward_impl.1} parent=1 // pred_check_branch
      %21 = sbr.rel (0) target = $region9
    $region8: #{_mlp_forward_impl.1} parent=1 // pred_region
      %23 = vsyncadd [#allocation3], 0
      %s24 = sshll.u32 %s1, 4
      %s25 = int_to_ptr.hbm [resolvable:$true] %s24
      %s26 = sshll.u32 [#allocation2], 4
      %s27 = int_to_ptr.vmem [resolvable:$true] %s26
      %32 = dma.hbm_to_vmem [thread:$0]  %s25, 512, %s27, [#allocation3], 64, 64, 4
    $region9: #{_mlp_forward_impl.1} parent=1 // pred_fallthru
      _
    // Predicated region
    $region10: #{_mlp_forward_impl.1} parent=1 // pred_check
      _
    $region11: #{_mlp_forward_impl.1} parent=1 // pred_check_branch
      %34 = sbr.rel (0) target = $region13
    $region12: #{_mlp_forward_impl.1} parent=1 // pred_region
      _
    $region13: #{_mlp_forward_impl.1} parent=1 // pred_fallthru
      _
    // Predicated region
    $region14: #{_mlp_forward_impl.1} parent=1 // pred_check
      _
    $region15: #{_mlp_forward_impl.1} parent=1 // pred_check_branch
      %36 = sbr.rel (0) target = $region17
    $region16: #{_mlp_forward_impl.1} parent=1 // pred_region
      %38 = vsyncadd [#allocation6], 0
      %s39 = sshll.u32 %s3, 4
      %s40 = int_to_ptr.hbm [resolvable:$true] %s39
      %s41 = sshll.u32 [#allocation5], 4
      %s42 = int_to_ptr.vmem [resolvable:$true] %s41
      %47 = dma.hbm_to_vmem [thread:$0]  %s40, 1024, %s42, [#allocation6], 64, 64, 4
    $region17: #{_mlp_forward_impl.1} parent=1 // pred_fallthru
      _
    // Predicated region
    $region18: #{_mlp_forward_impl.1} parent=1 // pred_check
      _
    $region19: #{_mlp_forward_impl.1} parent=1 // pred_check_branch
      %49 = sbr.rel (0) target = $region21
    $region20: #{_mlp_forward_impl.1} parent=1 // pred_region
      _
    $region21: #{_mlp_forward_impl.1} parent=1 // pred_fallthru
      _
    // Predicated region
    $region22: #{_mlp_forward_impl.1} parent=1 // pred_check
      _
    $region23: #{_mlp_forward_impl.1} parent=1 // pred_check_branch
      %51 = sbr.rel (0) target = $region25
    $region24: #{_mlp_forward_impl.1} parent=1 // pred_region
      %53 = vsyncadd [#allocation6], 0
      %s54 = sshll.u32 %s5, 4
      %s55 = int_to_ptr.hbm [resolvable:$true] %s54
      %s56 = sshll.u32 [#allocation7], 4
      %s57 = int_to_ptr.vmem [resolvable:$true] %s56
      %62 = dma.hbm_to_vmem [thread:$0]  %s55, 1024, %s57, [#allocation6], 64, 64, 4
    $region25: #{_mlp_forward_impl.1} parent=1 // pred_fallthru
      _
    // Predicated region
    $region26: #{_mlp_forward_impl.1} parent=1 // pred_check
      _
    $region27: #{_mlp_forward_impl.1} parent=1 // pred_check_branch
      %64 = sbr.rel (0) target = $region29
    $region28: #{_mlp_forward_impl.1} parent=1 // pred_region
      _
    $region29: #{_mlp_forward_impl.1} parent=1 // pred_fallthru
      _
    // Predicated region
    $region30: #{_mlp_forward_impl.1} parent=1 // pred_check
      _
    $region31: #{_mlp_forward_impl.1} parent=1 // pred_check_branch
      %66 = sbr.rel (0) target = $region33
    $region32: #{_mlp_forward_impl.1} parent=1 // pred_region
      %68 = vsyncadd [#allocation9], 0
      %s69 = sshll.u32 %s7, 4
      %s70 = int_to_ptr.hbm [resolvable:$true] %s69
      %s71 = sshll.u32 [#allocation8], 4
      %s72 = int_to_ptr.vmem [resolvable:$true] %s71
      %77 = dma.hbm_to_vmem [thread:$0]  %s70, 1024, %s72, [#allocation9], 64, 64, 4
    $region33: #{_mlp_forward_impl.1} parent=1 // pred_fallthru
      _
    // Predicated region
    $region34: #{_mlp_forward_impl.1} parent=1 // pred_check
      _
    $region35: #{_mlp_forward_impl.1} parent=1 // pred_check_branch
      %79 = sbr.rel (0) target = $region37
    $region36: #{_mlp_forward_impl.1} parent=1 // pred_region
      _
    $region37: #{_mlp_forward_impl.1} parent=1 // pred_fallthru
      _
    // Predicated region
    $region38: #{_mlp_forward_impl.1} parent=1 // pred_check
      _
    $region39: #{_mlp_forward_impl.1} parent=1 // pred_check_branch
      %81 = sbr.rel (0) target = $region41
    $region40: #{_mlp_forward_impl.1} parent=1 // pred_region
      %83 = dma.done [#allocation3], 512
    $region41: #{_mlp_forward_impl.1} parent=1 // pred_fallthru
      _
    // Predicated region
    $region42: #{_mlp_forward_impl.1} parent=1 // pred_check
      _
    $region43: #{_mlp_forward_impl.1} parent=1 // pred_check_branch
      %85 = sbr.rel (0) target = $region45
    $region44: #{_mlp_forward_impl.1} parent=1 // pred_region
      %87 = dma.done [#allocation6], 1024
    $region45: #{_mlp_forward_impl.1} parent=1 // pred_fallthru
      _
    // Predicated region
    $region46: #{_mlp_forward_impl.1} parent=1 // pred_check
      _
    $region47: #{_mlp_forward_impl.1} parent=1 // pred_check_branch
      %89 = sbr.rel (0) target = $region49
    $region48: #{_mlp_forward_impl.1} parent=1 // pred_region
      %91 = dma.done [#allocation6], 1024
    $region49: #{_mlp_forward_impl.1} parent=1 // pred_fallthru
      _
    // Predicated region
    $region50: #{_mlp_forward_impl.1} parent=1 // pred_check
      _
    $region51: #{_mlp_forward_impl.1} parent=1 // pred_check_branch
      %93 = sbr.rel (0) target = $region53
    $region52: #{_mlp_forward_impl.1} parent=1 // pred_region
      %95 = dma.done [#allocation9], 1024
    $region53: #{_mlp_forward_impl.1} parent=1 // pred_fallthru
      _
    %v97 = vld [vmem:[%s0] sm:$0x3]
    %v98 = vpack.c.bf16 %v97, %v97
    %v99 = vld [vmem:[#allocation2] sm:$0xf]
    %v100 = vld [vmem:[#allocation2 + $0x4] sm:$0xf]
    %v101 = vld [vmem:[#allocation2 + $0x8] sm:$0xf]
    %v102 = vld [vmem:[#allocation2 + $0xc] sm:$0xf]
    %v103 = vld [vmem:[#allocation2 + $0x10] sm:$0xf]
    %v104 = vld [vmem:[#allocation2 + $0x14] sm:$0xf]
    %v105 = vld [vmem:[#allocation2 + $0x18] sm:$0xf]
    %v106 = vld [vmem:[#allocation2 + $0x1c] sm:$0xf]
    %v107 = vld [vmem:[%s2] sm:$0x1]
    %v109 = vperm.slane %v107, 0
    %v119 = vunpack.c.l.b16 %v99
    %v120 = vunpack.c.l.b16 %v100
    %v121 = vunpack.c.l.b16 %v101
    %v122 = vunpack.c.l.b16 %v102
    %v123 = vunpack.c.l.b16 %v103
    %v124 = vunpack.c.l.b16 %v104
    %v125 = vunpack.c.l.b16 %v105
    %v126 = vunpack.c.l.b16 %v106
    %v127 = vpack.c.b16 %v120, %v119
    %v128 = vpack.c.b16 %v122, %v121
    %v129 = vpack.c.b16 %v124, %v123
    %v130 = vpack.c.b16 %v126, %v125
    %vm135 = vcmask 523264
    %v137 = vsel %vm135, %v98, 0
    %139 = vmatpush.bf16.msra.mxu0 0
    %140 = vmatpush.bf16.msra.mxu0 0
    %141 = vmatpush.bf16.msra.mxu0 0
    %142 = vmatpush.bf16.msra.mxu0 0
    %143 = vmatpush.bf16.msra.mxu0 %v130
    %144 = vmatpush.bf16.msra.mxu0 %v129
    %145 = vmatpush.bf16.msra.mxu0 %v128
    %146 = vmatpush.bf16.msra.mxu0 %v127
    %147 = vmatmul.bf16.gmra.mxu0 %v137
    %v148 = vpop.f32.mrf.mxu0
    %v149 = vadd.f32 %v109, %v148
    %v150 = vpop.f32.mrf.mxu0
    %151 = vdwg.mxu0
    %v152 = vmax.f32 %v149, 0.0
    %v153 = vpack.c.bf16 %v152, %v152
    %v154 = vld [vmem:[#allocation5] sm:$0xf]
    %v155 = vld [vmem:[#allocation5 + $0x4] sm:$0xf]
    %v156 = vld [vmem:[#allocation5 + $0x8] sm:$0xf]
    %v157 = vld [vmem:[#allocation5 + $0xc] sm:$0xf]
    %v158 = vld [vmem:[#allocation5 + $0x10] sm:$0xf]
    %v159 = vld [vmem:[#allocation5 + $0x14] sm:$0xf]
    %v160 = vld [vmem:[#allocation5 + $0x18] sm:$0xf]
    %v161 = vld [vmem:[#allocation5 + $0x1c] sm:$0xf]
    %v162 = vld [vmem:[#allocation5 + $0x20] sm:$0xf]
    %v163 = vld [vmem:[#allocation5 + $0x24] sm:$0xf]
    %v164 = vld [vmem:[#allocation5 + $0x28] sm:$0xf]
    %v165 = vld [vmem:[#allocation5 + $0x2c] sm:$0xf]
    %v166 = vld [vmem:[#allocation5 + $0x30] sm:$0xf]
    %v167 = vld [vmem:[#allocation5 + $0x34] sm:$0xf]
    %v168 = vld [vmem:[#allocation5 + $0x38] sm:$0xf]
    %v169 = vld [vmem:[#allocation5 + $0x3c] sm:$0xf]
    %v170 = vld [vmem:[%s4] sm:$0x1]
    %v172 = vperm.slane %v170, 0
    %v190 = vunpack.c.l.b16 %v154
    %v191 = vunpack.c.l.b16 %v155
    %v192 = vunpack.c.l.b16 %v156
    %v193 = vunpack.c.l.b16 %v157
    %v194 = vunpack.c.l.b16 %v158
    %v195 = vunpack.c.l.b16 %v159
    %v196 = vunpack.c.l.b16 %v160
    %v197 = vunpack.c.l.b16 %v161
    %v198 = vunpack.c.l.b16 %v162
    %v199 = vunpack.c.l.b16 %v163
    %v200 = vunpack.c.l.b16 %v164
    %v201 = vunpack.c.l.b16 %v165
    %v202 = vunpack.c.l.b16 %v166
    %v203 = vunpack.c.l.b16 %v167
    %v204 = vunpack.c.l.b16 %v168
    %v205 = vunpack.c.l.b16 %v169
    %v206 = vpack.c.b16 %v191, %v190
    %v207 = vpack.c.b16 %v193, %v192
    %v208 = vpack.c.b16 %v195, %v194
    %v209 = vpack.c.b16 %v197, %v196
    %v210 = vpack.c.b16 %v199, %v198
    %v211 = vpack.c.b16 %v201, %v200
    %v212 = vpack.c.b16 %v203, %v202
    %v213 = vpack.c.b16 %v205, %v204
    %222 = vmatpush.bf16.msra.mxu0 %v213
    %223 = vmatpush.bf16.msra.mxu0 %v212
    %224 = vmatpush.bf16.msra.mxu0 %v211
    %225 = vmatpush.bf16.msra.mxu0 %v210
    %226 = vmatpush.bf16.msra.mxu0 %v209
    %227 = vmatpush.bf16.msra.mxu0 %v208
    %228 = vmatpush.bf16.msra.mxu0 %v207
    %229 = vmatpush.bf16.msra.mxu0 %v206
    %230 = vmatmul.bf16.gmra.mxu0 %v153
    %v231 = vpop.f32.mrf.mxu0
    %v232 = vadd.f32 %v172, %v231
    %v233 = vpop.f32.mrf.mxu0
    %234 = vdwg.mxu0
    %v235 = vmax.f32 %v232, 0.0
    %v236 = vpack.c.bf16 %v235, %v235
    %v237 = vld [vmem:[#allocation7] sm:$0xf]
    %v238 = vld [vmem:[#allocation7 + $0x4] sm:$0xf]
    %v239 = vld [vmem:[#allocation7 + $0x8] sm:$0xf]
    %v240 = vld [vmem:[#allocation7 + $0xc] sm:$0xf]
    %v241 = vld [vmem:[#allocation7 + $0x10] sm:$0xf]
    %v242 = vld [vmem:[#allocation7 + $0x14] sm:$0xf]
    %v243 = vld [vmem:[#allocation7 + $0x18] sm:$0xf]
    %v244 = vld [vmem:[#allocation7 + $0x1c] sm:$0xf]
    %v245 = vld [vmem:[#allocation7 + $0x20] sm:$0xf]
    %v246 = vld [vmem:[#allocation7 + $0x24] sm:$0xf]
    %v247 = vld [vmem:[#allocation7 + $0x28] sm:$0xf]
    %v248 = vld [vmem:[#allocation7 + $0x2c] sm:$0xf]
    %v249 = vld [vmem:[#allocation7 + $0x30] sm:$0xf]
    %v250 = vld [vmem:[#allocation7 + $0x34] sm:$0xf]
    %v251 = vld [vmem:[#allocation7 + $0x38] sm:$0xf]
    %v252 = vld [vmem:[#allocation7 + $0x3c] sm:$0xf]
    %v253 = vld [vmem:[%s6] sm:$0x1]
    %v255 = vperm.slane %v253, 0
    %v273 = vunpack.c.l.b16 %v237
    %v274 = vunpack.c.l.b16 %v238
    %v275 = vunpack.c.l.b16 %v239
    %v276 = vunpack.c.l.b16 %v240
    %v277 = vunpack.c.l.b16 %v241
    %v278 = vunpack.c.l.b16 %v242
    %v279 = vunpack.c.l.b16 %v243
    %v280 = vunpack.c.l.b16 %v244
    %v281 = vunpack.c.l.b16 %v245
    %v282 = vunpack.c.l.b16 %v246
    %v283 = vunpack.c.l.b16 %v247
    %v284 = vunpack.c.l.b16 %v248
    %v285 = vunpack.c.l.b16 %v249
    %v286 = vunpack.c.l.b16 %v250
    %v287 = vunpack.c.l.b16 %v251
    %v288 = vunpack.c.l.b16 %v252
    %v289 = vpack.c.b16 %v274, %v273
    %v290 = vpack.c.b16 %v276, %v275
    %v291 = vpack.c.b16 %v278, %v277
    %v292 = vpack.c.b16 %v280, %v279
    %v293 = vpack.c.b16 %v282, %v281
    %v294 = vpack.c.b16 %v284, %v283
    %v295 = vpack.c.b16 %v286, %v285
    %v296 = vpack.c.b16 %v288, %v287
    %305 = vmatpush.bf16.msra.mxu0 %v296
    %306 = vmatpush.bf16.msra.mxu0 %v295
    %307 = vmatpush.bf16.msra.mxu0 %v294
    %308 = vmatpush.bf16.msra.mxu0 %v293
    %309 = vmatpush.bf16.msra.mxu0 %v292
    %310 = vmatpush.bf16.msra.mxu0 %v291
    %311 = vmatpush.bf16.msra.mxu0 %v290
    %312 = vmatpush.bf16.msra.mxu0 %v289
    %313 = vmatmul.bf16.gmra.mxu0 %v236
    %v314 = vpop.f32.mrf.mxu0
    %v315 = vadd.f32 %v255, %v314
    %v316 = vpop.f32.mrf.mxu0
    %317 = vdwg.mxu0
    %v318 = vmax.f32 %v315, 0.0
    %v319 = vpack.c.bf16 %v318, %v318
    %v320 = vld [vmem:[#allocation8] sm:$0xf]
    %v321 = vld [vmem:[#allocation8 + $0x4] sm:$0xf]
    %v322 = vld [vmem:[#allocation8 + $0x8] sm:$0xf]
    %v323 = vld [vmem:[#allocation8 + $0xc] sm:$0xf]
    %v324 = vld [vmem:[#allocation8 + $0x10] sm:$0xf]
    %v325 = vld [vmem:[#allocation8 + $0x14] sm:$0xf]
    %v326 = vld [vmem:[#allocation8 + $0x18] sm:$0xf]
    %v327 = vld [vmem:[#allocation8 + $0x1c] sm:$0xf]
    %v328 = vld [vmem:[#allocation8 + $0x20] sm:$0xf]
    %v329 = vld [vmem:[#allocation8 + $0x24] sm:$0xf]
    %v330 = vld [vmem:[#allocation8 + $0x28] sm:$0xf]
    %v331 = vld [vmem:[#allocation8 + $0x2c] sm:$0xf]
    %v332 = vld [vmem:[#allocation8 + $0x30] sm:$0xf]
    %v333 = vld [vmem:[#allocation8 + $0x34] sm:$0xf]
    %v334 = vld [vmem:[#allocation8 + $0x38] sm:$0xf]
    %v335 = vld [vmem:[#allocation8 + $0x3c] sm:$0xf]
    %v336 = vld [vmem:[%s8] sm:$0x1]
    %v338 = vperm.slane %v336, 0
    %v356 = vunpack.c.l.b16 %v320
    %v357 = vunpack.c.l.b16 %v321
    %v358 = vunpack.c.l.b16 %v322
    %v359 = vunpack.c.l.b16 %v323
    %v360 = vunpack.c.l.b16 %v324
    %v361 = vunpack.c.l.b16 %v325
    %v362 = vunpack.c.l.b16 %v326
    %v363 = vunpack.c.l.b16 %v327
    %v364 = vunpack.c.l.b16 %v328
    %v365 = vunpack.c.l.b16 %v329
    %v366 = vunpack.c.l.b16 %v330
    %v367 = vunpack.c.l.b16 %v331
    %v368 = vunpack.c.l.b16 %v332
    %v369 = vunpack.c.l.b16 %v333
    %v370 = vunpack.c.l.b16 %v334
    %v371 = vunpack.c.l.b16 %v335
    %v372 = vpack.c.b16 %v357, %v356
    %v373 = vpack.c.b16 %v359, %v358
    %v374 = vpack.c.b16 %v361, %v360
    %v375 = vpack.c.b16 %v363, %v362
    %v376 = vpack.c.b16 %v365, %v364
    %v377 = vpack.c.b16 %v367, %v366
    %v378 = vpack.c.b16 %v369, %v368
    %v379 = vpack.c.b16 %v371, %v370
    %388 = vmatpush.bf16.msra.mxu0 %v379
    %389 = vmatpush.bf16.msra.mxu0 %v378
    %390 = vmatpush.bf16.msra.mxu0 %v377
    %391 = vmatpush.bf16.msra.mxu0 %v376
    %392 = vmatpush.bf16.msra.mxu0 %v375
    %393 = vmatpush.bf16.msra.mxu0 %v374
    %394 = vmatpush.bf16.msra.mxu0 %v373
    %395 = vmatpush.bf16.msra.mxu0 %v372
    %396 = vmatmul.bf16.gmra.mxu0 %v319
    %v397 = vpop.f32.mrf.mxu0
    %v398 = vadd.f32 %v338, %v397
    %v399 = vpop.f32.mrf.mxu0
    %400 = vdwg.mxu0
    %401 = vst [vmem:[#allocation10] sm:$0x3] %v398
    // Predicated region
    $region54: #{_mlp_forward_impl.1} parent=1 // pred_check
      _
    $region55: #{_mlp_forward_impl.1} parent=1 // pred_check_branch
      %403 = sbr.rel (0) target = $region57
    $region56: #{_mlp_forward_impl.1} parent=1 // pred_region
      %405 = vsyncadd [#allocation4], 0
      %s407 = sshll.u32 [#allocation10], 4
      %s408 = int_to_ptr.vmem [resolvable:$true] %s407
      %s409 = sshll.u32 %s9, 4
      %s410 = int_to_ptr.hbm [resolvable:$true] %s409
      %412 = dma.vmem_to_hbm [thread:$0]  %s408, 32, %s410, [#allocation4]
    $region57: #{_mlp_forward_impl.1} parent=1 // pred_fallthru
      _
    // Predicated region
    $region58: #{_mlp_forward_impl.1} parent=1 // pred_check
      _
    $region59: #{_mlp_forward_impl.1} parent=1 // pred_check_branch
      %414 = sbr.rel (0) target = $region61
    $region60: #{_mlp_forward_impl.1} parent=1 // pred_region
      %416 = dma.done [#allocation4], 32
    $region61: #{_mlp_forward_impl.1} parent=1 // pred_fallthru
      _
    %417 = vsyncpa [#allocation3], 1
    %418 = vsyncpa [#allocation6], 1
    %419 = vsyncpa [#allocation9], 1
    %420 = vsyncpa [#allocation4], 1

</llo_original>
